<compile_context>
chip_gen: v6e
topology: v6e:2x2x1
jax: 0.10.0
libtpu: 0.0.40
codegen_flags: <defaults>
</compile_context>

<pallas_src>
import functools

import jax
import jax.numpy as jnp
from jax.experimental import pallas as pl
from jax.experimental.pallas import tpu as pltpu


# ----------------------------- small static helpers -----------------------------

def _round_up(x, m):
    return ((x + m - 1) // m) * m


def _static_and(a, b):
    """AND of conditions where either side may be the Python literal True."""
    if a is True:
        return b
    if b is True:
        return a
    return jnp.logical_and(a, b)


def _maybe_when(cond, fn):
    """Run fn unconditionally if cond is statically True, else under pl.when."""
    if cond is True:
        fn()
    else:
        pl.when(cond)(fn)


def _vmem_caps():
    """(physical VMEM bytes, usable budget) for the current TPU generation."""
    cap = 64 << 20  # conservative default (v7x per-core VMEM)
    try:
        info = pltpu.get_tpu_info()
        cap = int(getattr(info, "vmem_capacity_bytes", cap))
    except Exception:
        pass
    return cap, int(cap * 0.70)


def _vmem_estimate(tm, tn, tk, item):
    """Rough VMEM footprint of the pipelined kernel at a given tiling."""
    x_b = 2 * tm * tk * item          # double-buffered activation tiles
    w_b = 2 * tn * tk * item          # double-buffered streamed weight tiles
    o_b = 2 * tm * tn * 4             # double-buffered f32 logits tiles
    p_b = 2 * tm * 128 * 4            # double-buffered pred slab
    s_b = 2 * tm * 128 * 4            # (TM, 1) scratches pad lanes to 128
    return x_b + w_b + o_b + p_b + s_b


# ----------------------------- one-time weight prep ------------------------------

def prepare_probe_weight(weight, compute_dtype=jnp.bfloat16, tn_cap=2048, tk_cap=2048):
    """One-time preparation of the PyTorch nn.Linear weight (shape (V, nh)).

    Returns (w_prepared, meta):
      w_prepared: (nh_pad, V_pad) array in compute_dtype, canonical MXU RHS layout.
      meta:       static tiling / shape info consumed by ae_probe_linear_pallas.

    Call this ONCE per probe weight, outside the jitted hot path (the kernel is
    weight-HBM-stream bound, so re-casting/padding per call would dominate).
    """
    V, nh = weight.shape

    # --- V (lane) tiling: always pad V to a multiple of 128 for lane-dense stores.
    V_pad = _round_up(V, 128)
    tn_cap_eff = min(tn_cap, V_pad)
    # Prefer the largest 128-multiple tile that divides V_pad (no extra padding,
    # no post-kernel slice) ...
    TN = max(t for t in range(128, tn_cap_eff + 1, 128) if V_pad % t == 0)
    # ... unless that leaves many tiny grid steps (~0.35us fixed cost each); then
    # pad V up to a full-cap tile instead.
    if V_pad // TN > 32 and TN < tn_cap_eff:
        TN = tn_cap_eff
        V_pad = _round_up(V_pad, TN)

    # --- K (nh) tiling: only when nh alone would blow the VMEM budget.
    if nh <= tk_cap:
        TK, nh_pad = nh, nh
    elif nh % 128 == 0:
        TK = max(t for t in range(128, tk_cap + 1, 128) if nh % t == 0)
        nh_pad = nh
    else:
        TK = 1024
        nh_pad = _round_up(nh, TK)

    w = weight.astype(compute_dtype)
    if V_pad != V or nh_pad != nh:
        w = jnp.pad(w, ((0, V_pad - V), (0, nh_pad - nh)))
    w = jnp.transpose(w)  # (nh_pad, V_pad): one-time transpose; kernel does (TM,TK)@(TK,TN)

    meta = dict(V=V, nh=nh, V_pad=V_pad, nh_pad=nh_pad, TN=TN, TK=TK,
                compute_dtype=compute_dtype)
    return w, meta


# ----------------------------------- kernel --------------------------------------

def ae_probe_kernel(x_ref, w_ref, logits_ref, pred_ref, vmax_ref, vidx_ref,
                    *, v_total, tn, nv, nk, v_has_pad):
    """One (TM, TN) logits tile (optionally accumulated over K) + running argmax.

    x_ref:      (TM, TK)  compute dtype activations
    w_ref:      (TK, TN)  compute dtype weight tile (pre-transposed in HBM)
    logits_ref: (TM, TN)  f32 output tile; also the K accumulator (resident over k)
    pred_ref:   (TM, 128) int32 lane-dense argmax slab (resident over j, k)
    vmax_ref:   (TM, 1)   f32 running max scratch
    vidx_ref:   (TM, 1)   int32 running argmax scratch
    nv, nk:     static grid extents along the V and K axes
    """
    j = pl.program_id(1)
    k = pl.program_id(2) if nk > 1 else None

    # ---- init running argmax state at the start of each M tile ----
    init_cond = True
    if nv > 1:
        init_cond = _static_and(init_cond, j == 0)
    if nk > 1:
        init_cond = _static_and(init_cond, k == 0)

    def _init():
        vmax_ref[...] = jnp.full(vmax_ref.shape, -jnp.inf, vmax_ref.dtype)
        vidx_ref[...] = jnp.zeros(vidx_ref.shape, vidx_ref.dtype)

    _maybe_when(init_cond, _init)

    # ---- matmul on the MXU; accumulate into the resident f32 logits tile ----
    part = jnp.dot(x_ref[...], w_ref[...], preferred_element_type=jnp.float32)
    if nk == 1:
        logits_ref[...] = part
    else:
        @pl.when(k == 0)
        def _zero():
            logits_ref[...] = jnp.zeros_like(logits_ref)
        logits_ref[...] += part

    last_k = True if nk == 1 else (k == nk - 1)
    last_j = True if nv == 1 else (j == nv - 1)

    # ---- running argmax over vocab (softmax dropped: argmax(softmax(x)) == argmax(x))
    def _argmax_update(mask_padding):
        logits = logits_ref[...]
        col = jax.lax.broadcasted_iota(jnp.int32, logits.shape, 1) + j * tn
        vals = jnp.where(col < v_total, logits, -jnp.inf) if mask_padding else logits
        tmax = jnp.max(vals, axis=-1, keepdims=True)               # (TM, 1)
        big = jnp.int32(2 ** 30)
        tidx = jnp.min(jnp.where(vals >= tmax, col, big),
                       axis=-1, keepdims=True)                     # first max in tile
        better = tmax > vmax_ref[...]          # strict > keeps first-occurrence ties
        vidx_ref[...] = jnp.where(better, tidx, vidx_ref[...])
        vmax_ref[...] = jnp.maximum(vmax_ref[...], tmax)

    if v_has_pad and nv > 1:
        # Only the last V tile contains padding: mask there, raw logits elsewhere.
        _maybe_when(_static_and(last_k, j == nv - 1), lambda: _argmax_update(True))
        _maybe_when(_static_and(last_k, j != nv - 1), lambda: _argmax_update(False))
    else:
        _maybe_when(last_k, lambda: _argmax_update(v_has_pad))

    # ---- lane-dense pred store after the final vocab / K tile of this M tile ----
    def _store_pred():
        pred_ref[...] = jnp.broadcast_to(vidx_ref[...], pred_ref.shape)

    _maybe_when(_static_and(last_k, last_j), _store_pred)


# ----------------------------------- wrapper --------------------------------------

def ae_probe_linear_pallas(fhs, w_prepared, meta):
    """fhs: (B, T, nh); w_prepared/meta from prepare_probe_weight.

    Returns (output_logits (B, T, V) f32, pred_tokens (B, T) int32).
    """
    B, T, nh = fhs.shape
    assert nh == meta["nh"], "fhs hidden size does not match the prepared probe weight"
    V, V_pad, nh_pad = meta["V"], meta["V_pad"], meta["nh_pad"]
    TN, TK = meta["TN"], meta["TK"]
    dtype = meta["compute_dtype"]
    item = jnp.dtype(dtype).itemsize

    M = B * T
    cap, budget = _vmem_caps()

    # --- M tiling: prefer a single M tile so the weight is streamed exactly once.
    M8 = _round_up(max(M, 1), 8)
    TM = None
    for t in sorted({min(M8, 1024), 1024, 512, 256, 128, 64, 32, 16, 8}, reverse=True):
        if t > max(M8, 8):
            continue
        if _vmem_estimate(t, TN, TK, item) <= budget:
            TM = t
            break
    if TM is None:
        TM = 8  # TODO(synk): finer fallback (shrink TN/TK) if even (8, TN, TK) overflows VMEM.
    M_pad = _round_up(M8, TM)

    est = _vmem_estimate(TM, TN, TK, item)
    vmem_limit = int(min(max(budget, int(1.25 * est)), int(0.9 * cap)))

    # Activation prep stays in the hot path but is tiny relative to the weight stream.
    x = fhs.reshape(M, nh).astype(dtype)
    if M_pad != M or nh_pad != nh:
        x = jnp.pad(x, ((0, M_pad - M), (0, nh_pad - nh)))

    nm, nv, nk = M_pad // TM, V_pad // TN, nh_pad // TK
    v_has_pad = V_pad != V

    kernel = functools.partial(ae_probe_kernel, v_total=V, tn=TN,
                               nv=nv, nk=nk, v_has_pad=v_has_pad)

    # TODO(synk): when nm == 1 on v7x, the second TensorCore is idle; a 2-way V split
    # across cores with a tiny XLA-side argmax combine would engage it (measure first).
    logits_pad, pred_pad = pl.pallas_call(
        kernel,
        out_shape=(
            jax.ShapeDtypeStruct((M_pad, V_pad), jnp.float32),
            jax.ShapeDtypeStruct((M_pad, 128), jnp.int32),
        ),
        grid_spec=pltpu.PrefetchScalarGridSpec(
            num_scalar_prefetch=0,
            grid=(nm, nv, nk),
            in_specs=[
                pl.BlockSpec((TM, TK), lambda i, j, k: (i, k)),   # activations
                pl.BlockSpec((TK, TN), lambda i, j, k: (k, j)),   # streamed weight tiles
            ],
            out_specs=(
                pl.BlockSpec((TM, TN), lambda i, j, k: (i, j)),   # logits (K-resident)
                pl.BlockSpec((TM, 128), lambda i, j, k: (i, 0)),  # pred (V/K-resident)
            ),
            scratch_shapes=[
                pltpu.VMEM((TM, 1), jnp.float32),                 # running max
                pltpu.VMEM((TM, 1), jnp.int32),                   # running argmax
            ],
        ),
        compiler_params=pltpu.CompilerParams(
            dimension_semantics=("parallel", "arbitrary", "arbitrary"),
            vmem_limit_bytes=vmem_limit,
        ),
    )(x, w_prepared)

    if M_pad == M and V_pad == V:
        logits = logits_pad.reshape(B, T, V)
    else:
        logits = logits_pad[:M, :V].reshape(B, T, V)
    pred = pred_pad[:M, 0].reshape(B, T)
    return logits, pred


# ------------------------------- encoder stand-in ---------------------------------

def encoder_stub(surf, emb, w_enc):
    """Plain-JAX stand-in for args.pretrained_model.encoder.

    Returns fhs of shape (B, 1, nh), mimicking an LSTM final hidden state.
    """
    # TODO(synk): the real pretrained encoder (external nn module) has no definition
    # here; replaced with a deterministic embed + mean-pool + tanh.
    e = emb[surf]                         # (B, S, E)
    pooled = jnp.mean(e, axis=1)          # (B, E)
    fhs = jnp.tanh(pooled @ w_enc)        # (B, nh)
    return fhs[:, None, :]                # (B, 1, nh)


# -------------------------------------- demo ---------------------------------------

if __name__ == "__main__":
    # Small, deterministic shapes consistent with the module's forward.
    B, S = 2, 8          # batch, surface sequence length
    E = 16               # embedding dim of the stub encoder
    NH = 32              # args.nh (encoder hidden size)
    V = 64               # len(vocab.word2id)

    key = jax.random.PRNGKey(0)
    k_surf, k_emb, k_enc, k_lin = jax.random.split(key, 4)

    surf = jax.random.randint(k_surf, (B, S), 0, V, dtype=jnp.int32)
    emb = jax.random.normal(k_emb, (V, E), dtype=jnp.float32) * 0.1
    w_enc = jax.random.normal(k_enc, (E, NH), dtype=jnp.float32) * 0.1
    # nn.Linear(NH, V, bias=False) weight: shape (V, NH)
    lin_weight = jax.random.normal(k_lin, (V, NH), dtype=jnp.float32) * 0.1

    # One-time weight preparation (cast + pad + transpose hoisted out of the hot path).
    w_prep, meta = prepare_probe_weight(lin_weight)

    fhs = encoder_stub(surf, emb, w_enc)                      # (B, 1, NH)
    output_logits, pred_tokens = ae_probe_linear_pallas(fhs, w_prep, meta)

    output_logits = jax.block_until_ready(output_logits)
    pred_tokens = jax.block_until_ready(pred_tokens)

    # Reference using the same bf16 input cast / f32 accumulation.
    # NOTE: bf16 streaming means logits are not bit-identical to the f32 PyTorch Linear.
    x_ref = fhs.reshape(B, NH).astype(jnp.bfloat16)
    w_ref = lin_weight.astype(jnp.bfloat16)
    ref_logits = jax.lax.dot_general(
        x_ref, w_ref, dimension_numbers=(((1,), (1,)), ((), ())),
        preferred_element_type=jnp.float32).reshape(B, 1, V)
    ref_pred = jnp.argmax(ref_logits, axis=2)  # == argmax(softmax(logits, axis=2))

    assert output_logits.shape == (B, 1, V)
    assert pred_tokens.shape == (B, 1)
    assert jnp.allclose(output_logits, ref_logits, atol=1e-2, rtol=1e-2)
    assert jnp.array_equal(pred_tokens, ref_pred.astype(jnp.int32))

    print("KERNEL_OK")
</pallas_src>

<mosaic_0001>
module attributes {stable_mosaic.version = 11 : i64} {
  func.func @ae_probe_kernel(%arg0: i32, %arg1: i32, %arg2: i32, %arg3: memref<8x32xbf16, #tpu.memory_space<vmem>>, %arg4: memref<32x128xbf16, #tpu.memory_space<vmem>>, %arg5: memref<8x128xf32, #tpu.memory_space<vmem>>, %arg6: memref<8x128xi32, #tpu.memory_space<vmem>>, %arg7: memref<8x1xf32, #tpu.memory_space<vmem>>, %arg8: memref<8x1xi32, #tpu.memory_space<vmem>>) attributes {dimension_semantics = [#tpu.dimension_semantics<parallel>, #tpu.dimension_semantics<arbitrary>, #tpu.dimension_semantics<arbitrary>], iteration_bounds = array<i64: 1, 1, 1>, scalar_prefetch = 0 : i64, scratch_operands = 2 : i64, tpu.core_type = #tpu.core_type<tc>, window_params = [{transform_indices = @transform_0, window_bounds = array<i64: 8, 32>}, {transform_indices = @transform_1, window_bounds = array<i64: 32, 128>}, {transform_indices = @transform_2, window_bounds = array<i64: 8, 128>}, {transform_indices = @transform_3, window_bounds = array<i64: 8, 128>}]} {
    %cst = arith.constant 0xFF800000 : f32
    %0 = vector.broadcast %cst : f32 to vector<8x1xf32>
    %c0 = arith.constant 0 : index
    %c0_0 = arith.constant 0 : index
    %1 = vector.load %arg7[%c0, %c0_0] : memref<8x1xf32, #tpu.memory_space<vmem>>, vector<8x1xf32>
    tpu.vector_store %arg7[%c0, %c0_0], %0 {strides = array<i32>} : memref<8x1xf32, #tpu.memory_space<vmem>>, vector<8x1xf32>,
    %c0_i32 = arith.constant 0 : i32
    %2 = vector.broadcast %c0_i32 : i32 to vector<8x1xi32>
    %c0_1 = arith.constant 0 : index
    %c0_2 = arith.constant 0 : index
    %3 = vector.load %arg8[%c0_1, %c0_2] : memref<8x1xi32, #tpu.memory_space<vmem>>, vector<8x1xi32>
    tpu.vector_store %arg8[%c0_1, %c0_2], %2 {strides = array<i32>} : memref<8x1xi32, #tpu.memory_space<vmem>>, vector<8x1xi32>,
    %c0_3 = arith.constant 0 : index
    %c0_4 = arith.constant 0 : index
    %4 = vector.load %arg3[%c0_3, %c0_4] : memref<8x32xbf16, #tpu.memory_space<vmem>>, vector<8x32xbf16>
    %c0_5 = arith.constant 0 : index
    %c0_6 = arith.constant 0 : index
    %5 = vector.load %arg4[%c0_5, %c0_6] : memref<32x128xbf16, #tpu.memory_space<vmem>>, vector<32x128xbf16>
    %cst_7 = arith.constant dense<0.000000e+00> : vector<8x128xf32>
    %6 = tpu.matmul %4, %5, %cst_7 {dimension_numbers = #tpu.dot_dimension_numbers<[1], [0], [0], [1], [0, 0, 1, 1], [], []>} : vector<8x32xbf16>, vector<32x128xbf16>, vector<8x128xf32> -> vector<8x128xf32>
    %c0_8 = arith.constant 0 : index
    %c0_9 = arith.constant 0 : index
    %7 = vector.load %arg5[%c0_8, %c0_9] : memref<8x128xf32, #tpu.memory_space<vmem>>, vector<8x128xf32>
    tpu.vector_store %arg5[%c0_8, %c0_9], %6 {strides = array<i32>} : memref<8x128xf32, #tpu.memory_space<vmem>>, vector<8x128xf32>,
    %c0_10 = arith.constant 0 : index
    %c0_11 = arith.constant 0 : index
    %8 = vector.load %arg5[%c0_10, %c0_11] : memref<8x128xf32, #tpu.memory_space<vmem>>, vector<8x128xf32>
    %9 = tpu.iota {dimensions = array<i32: 1>} : vector<8x128xi32>
    %c128_i32 = arith.constant 128 : i32
    %10 = arith.muli %arg1, %c128_i32 : i32
    %11 = vector.broadcast %10 : i32 to vector<8x128xi32>
    %12 = arith.addi %9, %11 : vector<8x128xi32>
    %c64_i32 = arith.constant 64 : i32
    %13 = vector.broadcast %c64_i32 : i32 to vector<8x128xi32>
    %14 = arith.cmpi slt, %12, %13 : vector<8x128xi32>
    %cst_12 = arith.constant 0xFF800000 : f32
    %15 = vector.broadcast %cst_12 : f32 to vector<8x128xf32>
    %16 = arith.select %14, %8, %15 : vector<8x128xi1>, vector<8x128xf32>
    %cst_13 = arith.constant dense<0xFF800000> : vector<8xf32>
    %17 = vector.multi_reduction <maximumf>, %16, %cst_13 [1] : vector<8x128xf32> to vector<8xf32>
    %18 = vector.shape_cast %17 : vector<8xf32> to vector<8x1xf32>
    %19 = vector.broadcast %18 : vector<8x1xf32> to vector<8x128xf32>
    %20 = arith.cmpf oge, %16, %19 : vector<8x128xf32>
    %c1073741824_i32 = arith.constant 1073741824 : i32
    %21 = vector.broadcast %c1073741824_i32 : i32 to vector<8x128xi32>
    %22 = arith.select %20, %12, %21 : vector<8x128xi1>, vector<8x128xi32>
    %cst_14 = arith.constant dense<2147483647> : vector<8xi32>
    %23 = vector.multi_reduction <minsi>, %22, %cst_14 [1] : vector<8x128xi32> to vector<8xi32>
    %24 = vector.shape_cast %23 : vector<8xi32> to vector<8x1xi32>
    %c0_15 = arith.constant 0 : index
    %c0_16 = arith.constant 0 : index
    %25 = vector.load %arg7[%c0_15, %c0_16] : memref<8x1xf32, #tpu.memory_space<vmem>>, vector<8x1xf32>
    %26 = arith.cmpf ogt, %18, %25 : vector<8x1xf32>
    %c0_17 = arith.constant 0 : index
    %c0_18 = arith.constant 0 : index
    %27 = vector.load %arg8[%c0_17, %c0_18] : memref<8x1xi32, #tpu.memory_space<vmem>>, vector<8x1xi32>
    %28 = arith.select %26, %24, %27 : vector<8x1xi1>, vector<8x1xi32>
    %c0_19 = arith.constant 0 : index
    %c0_20 = arith.constant 0 : index
    %29 = vector.load %arg8[%c0_19, %c0_20] : memref<8x1xi32, #tpu.memory_space<vmem>>, vector<8x1xi32>
    tpu.vector_store %arg8[%c0_19, %c0_20], %28 {strides = array<i32>} : memref<8x1xi32, #tpu.memory_space<vmem>>, vector<8x1xi32>,
    %c0_21 = arith.constant 0 : index
    %c0_22 = arith.constant 0 : index
    %30 = vector.load %arg7[%c0_21, %c0_22] : memref<8x1xf32, #tpu.memory_space<vmem>>, vector<8x1xf32>
    %31 = arith.maximumf %30, %18 : vector<8x1xf32>
    %c0_23 = arith.constant 0 : index
    %c0_24 = arith.constant 0 : index
    %32 = vector.load %arg7[%c0_23, %c0_24] : memref<8x1xf32, #tpu.memory_space<vmem>>, vector<8x1xf32>
    tpu.vector_store %arg7[%c0_23, %c0_24], %31 {strides = array<i32>} : memref<8x1xf32, #tpu.memory_space<vmem>>, vector<8x1xf32>,
    %c0_25 = arith.constant 0 : index
    %c0_26 = arith.constant 0 : index
    %33 = vector.load %arg8[%c0_25, %c0_26] : memref<8x1xi32, #tpu.memory_space<vmem>>, vector<8x1xi32>
    %34 = vector.shape_cast %33 : vector<8x1xi32> to vector<8x1xi32>
    %35 = vector.broadcast %34 : vector<8x1xi32> to vector<8x128xi32>
    %c0_27 = arith.constant 0 : index
    %c0_28 = arith.constant 0 : index
    %36 = vector.load %arg6[%c0_27, %c0_28] : memref<8x128xi32, #tpu.memory_space<vmem>>, vector<8x128xi32>
    tpu.vector_store %arg6[%c0_27, %c0_28], %35 {strides = array<i32>} : memref<8x128xi32, #tpu.memory_space<vmem>>, vector<8x128xi32>,
    return
  }
  func.func @transform_0(%arg0: i32, %arg1: i32, %arg2: i32) -> (i32, i32) {
    %c0_i32 = arith.constant 0 : i32
    return %arg0, %arg2 : i32, i32
  }
  func.func @transform_1(%arg0: i32, %arg1: i32, %arg2: i32) -> (i32, i32) {
    %c0_i32 = arith.constant 0 : i32
    return %arg2, %arg1 : i32, i32
  }
  func.func @transform_2(%arg0: i32, %arg1: i32, %arg2: i32) -> (i32, i32) {
    %c0_i32 = arith.constant 0 : i32
    return %arg0, %arg1 : i32, i32
  }
  func.func @transform_3(%arg0: i32, %arg1: i32, %arg2: i32) -> (i32, i32) {
    %c0_i32 = arith.constant 0 : i32
    %c0_i32_0 = arith.constant 0 : i32
    return %arg0, %c0_i32 : i32, i32
  }
}

</mosaic_0001>

<llo_original>
// kernel: tpu_custom_call.1
$region0: #{tpu_custom_call.1}
  #allocation0 [shape = 'u32[]', space=smem, size = 0x4, offset = 0x4, fixed_abs, tag = 'smem constant byte address 0x4 - core index']
  #allocation1 [shape = 'u32[144,128]{1,0:T(1,128)}', space=vmem, size = 0x12000, scoped, tag = 'internal scratch']
  #allocation2 [shape = 'f32[8,1]{1,0:T(8,128)}', space=vmem, size = 0x1000, scoped, tag = 'scratch operand']
  #allocation3 [shape = 's32[8,1]{1,0:T(8,128)}', space=vmem, size = 0x1000, scoped, tag = 'scratch operand']
  %s0 = inlined_call_operand.hbm [shape: bf16[8,32], index: 0, kind: input, shape index: {}]
  %s1 = inlined_call_operand.hbm [shape: bf16[32,128], index: 1, kind: input, shape index: {}]
  %s2 = inlined_call_operand.hbm [shape: f32[8,128], index: 2, kind: output, shape index: {0}]
  %s3 = inlined_call_operand.hbm [shape: s32[8,128], index: 3, kind: output, shape index: {1}]
  %4 = xla_tuple %s2, %s3
  %s5 = sld [smem:[#allocation0]]
  $region34: #{tpu_custom_call.1} parent=0
    _
  %s7 = ssub.s32 1, %s5
  %s8 = scalar_select 0, %s7, %s5
  $region1: #{tpu_custom_call.1} parent=0
    #allocation4 [shape = 'u8[2048]{0}', space=vmem, size = 0x800, scoped, tag = 'input window, operand 0, single buffered']
    #allocation5 [shape = 's32[1]{0}', space=sflag, size = 0x4, scoped, tag = 'scoped memory for tpu_custom_call.1']
    #allocation6 [shape = 's32[1]{0}', space=sflag, size = 0x4, scoped, tag = 'scoped memory for tpu_custom_call.1']
    #allocation7 [shape = 'u8[8192]{0}', space=vmem, size = 0x2000, scoped, tag = 'input window, operand 1, single buffered']
    #allocation8 [shape = 's32[1]{0}', space=sflag, size = 0x4, scoped, tag = 'scoped memory for tpu_custom_call.1']
    #allocation9 [shape = 'u8[4096]{0}', space=vmem, size = 0x1000, scoped, tag = 'output window, operand 0, single buffered']
    #allocation10 [shape = 'u8[4096]{0}', space=vmem, size = 0x1000, scoped, tag = 'output window, operand 1, single buffered']
    #allocation11 [shape = 's32[1]{0}', space=sflag, size = 0x4, scoped, tag = 'scoped memory for tpu_custom_call.1']
    %9 = vsyncpa [#allocation5], 0
    %10 = vsyncpa [#allocation8], 0
    %11 = vsyncpa [#allocation6], 0
    %12 = vsyncpa [#allocation11], 0
    // Predicated region
    $region2: #{tpu_custom_call.1} parent=1 // pred_check
      _
    $region3: #{tpu_custom_call.1} parent=1 // pred_check_branch
      %14 = sbr.rel (0) target = $region5
    $region4: #{tpu_custom_call.1} parent=1 // pred_region
      %s16 = ssub.s32 64, 64
      %17 = vsyncadd [#allocation5], %s16
      %s19 = sshll.u32 [#allocation4], 4
      %s20 = int_to_ptr.vmem [resolvable:$true] %s19
      %22 = dma.hbm_to_vmem [thread:$0]  %s0, 64, %s20, [#allocation5]
    $region5: #{tpu_custom_call.1} parent=1 // pred_fallthru
      _
    // Predicated region
    $region6: #{tpu_custom_call.1} parent=1 // pred_check
      _
    $region7: #{tpu_custom_call.1} parent=1 // pred_check_branch
      %24 = sbr.rel (0) target = $region9
    $region8: #{tpu_custom_call.1} parent=1 // pred_region
      %s26 = ssub.s32 256, 256
      %27 = vsyncadd [#allocation8], %s26
      %s28 = sshll.u32 [#allocation7], 4
      %s29 = int_to_ptr.vmem [resolvable:$true] %s28
      %34 = dma.hbm_to_vmem [thread:$0]  %s1, 256, %s29, [#allocation8], 64, 64, 4
    $region9: #{tpu_custom_call.1} parent=1 // pred_fallthru
      _
    // Predicated region
    $region10: #{tpu_custom_call.1} parent=1 // pred_check
      _
    $region11: #{tpu_custom_call.1} parent=1 // pred_check_branch
      %36 = sbr.rel (0) target = $region13
    $region12: #{tpu_custom_call.1} parent=1 // pred_region
      %37 = dma.done [#allocation5], 64
    $region13: #{tpu_custom_call.1} parent=1 // pred_fallthru
      _
    // Predicated region
    $region14: #{tpu_custom_call.1} parent=1 // pred_check
      _
    $region15: #{tpu_custom_call.1} parent=1 // pred_check_branch
      %39 = sbr.rel (0) target = $region17
    $region16: #{tpu_custom_call.1} parent=1 // pred_region
      %40 = dma.done [#allocation8], 256
    $region17: #{tpu_custom_call.1} parent=1 // pred_fallthru
      _
    %vm42 = vcmask 7168
    %43 = vst.msk [vmem:[#allocation2] sm:$0xff] %vm42, -inf
    %44 = vst.msk [vmem:[#allocation3] sm:$0xff] %vm42, 0
    %v45 = vld [vmem:[#allocation4] sm:$0xf]
    %v46 = vld [vmem:[#allocation7] sm:$0xf]
    %v47 = vld [vmem:[#allocation7 + $0x4] sm:$0xf]
    %v48 = vld [vmem:[#allocation7 + $0x8] sm:$0xf]
    %v49 = vld [vmem:[#allocation7 + $0xc] sm:$0xf]
    %v54 = vunpack.c.l.b16 %v46
    %v55 = vunpack.c.l.b16 %v47
    %v56 = vunpack.c.l.b16 %v48
    %v57 = vunpack.c.l.b16 %v49
    %v58 = vpack.c.b16 %v55, %v54
    %v59 = vpack.c.b16 %v57, %v56
    %vm62 = vcmask 261120
    %v64 = vsel %vm62, %v45, 0
    %66 = vmatprep.subr.bf16.mxu0 0
    %67 = vmatpush1.bf16.msra.mxu0 0
    %68 = vmatprep.subr.bf16.mxu0 0
    %69 = vmatpush1.bf16.msra.mxu0 0
    %70 = vmatprep.subr.bf16.mxu0 0
    %71 = vmatpush1.bf16.msra.mxu0 0
    %72 = vmatprep.subr.bf16.mxu0 0
    %73 = vmatpush1.bf16.msra.mxu0 0
    %74 = vmatprep.subr.bf16.mxu0 0
    %75 = vmatpush1.bf16.msra.mxu0 0
    %76 = vmatprep.subr.bf16.mxu0 0
    %77 = vmatpush1.bf16.msra.mxu0 0
    %78 = vmatprep.subr.bf16.mxu0 0
    %79 = vmatpush1.bf16.msra.mxu0 %v59
    %80 = vmatprep.subr.bf16.mxu0 0
    %81 = vmatpush1.bf16.msra.mxu0 %v58
    %82 = vmatprep.subr.bf16.mxu0 0
    %83 = vmatpush2.bf16.msra.mxu0 0
    %84 = vmatprep.subr.bf16.mxu0 0
    %85 = vmatpush2.bf16.msra.mxu0 0
    %86 = vmatprep.subr.bf16.mxu0 0
    %87 = vmatpush2.bf16.msra.mxu0 0
    %88 = vmatprep.subr.bf16.mxu0 0
    %89 = vmatpush2.bf16.msra.mxu0 0
    %90 = vmatprep.subr.bf16.mxu0 0
    %91 = vmatpush2.bf16.msra.mxu0 0
    %92 = vmatprep.subr.bf16.mxu0 0
    %93 = vmatpush2.bf16.msra.mxu0 0
    %94 = vmatprep.subr.bf16.mxu0 0
    %95 = vmatpush2.bf16.msra.mxu0 0
    %96 = vmatprep.subr.bf16.mxu0 0
    %97 = vmatpush2.bf16.msra.mxu0 0
    %98 = vmatprep.mubr.bf16.mxu0 0
    %99 = vmatmul.mubr.bf16.gmra.mxu0 %v64
    %v100 = vpop.f32.mrf.mxu0
    %v101 = vadd.f32 0.0, %v100
    %v102 = vpop.f32.mrf.mxu0
    %v103 = vpop.f32.mrf.mxu0
    %v104 = vpop.f32.mrf.mxu0
    %105 = vdwg.mxu0
    %106 = vst [vmem:[#allocation9] sm:$0xff] %v101
    %v107 = vld [vmem:[#allocation9] sm:$0xff]
    %v108 = vlaneseq
    %v109 = vand.u32 %v108, 127
    %s110 = smul.u32 0, 128
    %v111 = vstv %s110
    %v112 = vadd.s32 %v109, %v111
    %vm113 = vcmp.lt.s32.totalorder %v112, 64
    %v114 = vsel %vm113, %v107, -inf
    %115 = vmax.xlane.f32.xlu0 %v114
    %v116 = vpop.xlane.xlu0 %115
    %vm117 = vcmp.ge.f32.partialorder %v114, %v116
    %v118 = vsel %vm117, %v112, 1073741824
    %v119 = vand.u32 %v118, 65535
    %v120 = vshra.s32 %v118, 16
    %v121 = vcvt.s32.f32 %v119
    %v122 = vcvt.s32.f32 %v120
    %123 = vmin.xlane.f32.xlu0 %v122
    %v124 = vpop.xlane.xlu0 %123
    %vm125 = vcmp.eq.f32.partialorder %v122, %v124
    %v126 = vsel %vm125, %v121, inf
    %127 = vmin.xlane.f32.xlu0 %v126
    %v128 = vpop.xlane.xlu0 %127
    %v129 = vcvt.f32.s32 %v128
    %v130 = vcvt.f32.s32 %v124
    %v131 = vshll.u32 %v130, 16
    %v132 = vadd.s32 %v131, %v129
    %v133 = vld [vmem:[#allocation2] sm:$0xff]
    %vm134 = vcmp.gt.f32.partialorder %v116, %v133
    %v135 = vld [vmem:[#allocation3] sm:$0xff]
    %v136 = vsel %vm134, %v132, %v135
    %137 = vst.msk [vmem:[#allocation3] sm:$0xff] %vm42, %v136
    %v138 = vld [vmem:[#allocation2] sm:$0xff]
    %v139 = vmax.f32 %v138, %v116
    %140 = vst.msk [vmem:[#allocation2] sm:$0xff] %vm42, %v139
    %v141 = vld [vmem:[#allocation3] sm:$0xff]
    %142 = vset.pattern.permute.xlu0 0
    %143 = vperm.xlu0 %142, %v141
    %v144 = vpop.permute.xlu0 %143
    %145 = vst [vmem:[#allocation10] sm:$0xff] %v144
    // Predicated region
    $region18: #{tpu_custom_call.1} parent=1 // pred_check
      _
    $region19: #{tpu_custom_call.1} parent=1 // pred_check_branch
      %147 = sbr.rel (0) target = $region21
    $region20: #{tpu_custom_call.1} parent=1 // pred_region
      %s149 = ssub.s32 128, 128
      %150 = vsyncadd [#allocation6], %s149
      %s152 = sshll.u32 [#allocation9], 4
      %s153 = int_to_ptr.vmem [resolvable:$true] %s152
      %155 = dma.vmem_to_hbm [thread:$0]  %s153, 128, %s2, [#allocation6]
    $region21: #{tpu_custom_call.1} parent=1 // pred_fallthru
      _
    // Predicated region
    $region22: #{tpu_custom_call.1} parent=1 // pred_check
      _
    $region23: #{tpu_custom_call.1} parent=1 // pred_check_branch
      %157 = sbr.rel (0) target = $region25
    $region24: #{tpu_custom_call.1} parent=1 // pred_region
      %s159 = ssub.s32 128, 128
      %160 = vsyncadd [#allocation11], %s159
      %s162 = sshll.u32 [#allocation10], 4
      %s163 = int_to_ptr.vmem [resolvable:$true] %s162
      %165 = dma.vmem_to_hbm [thread:$0]  %s163, 128, %s3, [#allocation11]
    $region25: #{tpu_custom_call.1} parent=1 // pred_fallthru
      _
    // Predicated region
    $region26: #{tpu_custom_call.1} parent=1 // pred_check
      _
    $region27: #{tpu_custom_call.1} parent=1 // pred_check_branch
      %167 = sbr.rel (0) target = $region29
    $region28: #{tpu_custom_call.1} parent=1 // pred_region
      %168 = dma.done [#allocation6], 128
    $region29: #{tpu_custom_call.1} parent=1 // pred_fallthru
      _
    // Predicated region
    $region30: #{tpu_custom_call.1} parent=1 // pred_check
      _
    $region31: #{tpu_custom_call.1} parent=1 // pred_check_branch
      %170 = sbr.rel (0) target = $region33
    $region32: #{tpu_custom_call.1} parent=1 // pred_region
      %171 = dma.done [#allocation11], 128
    $region33: #{tpu_custom_call.1} parent=1 // pred_fallthru
      _
    %172 = vsyncpa [#allocation5], 1
    %173 = vsyncpa [#allocation8], 1
    %174 = vsyncpa [#allocation6], 1
    %175 = vsyncpa [#allocation11], 1

</llo_original>
